<compile_context>
chip_gen: v5e
topology: v5e:2x2
jax: 0.10.0
libtpu: 0.0.40
codegen_flags: <defaults>
</compile_context>

<pallas_src>
import functools

import numpy as np
import jax
import jax.numpy as jnp
from jax import lax
from jax.experimental import pallas as pl
from jax.experimental.pallas import tpu as pltpu


def _rbf_tile_kernel(scalars_ref, xr_ref, xc_ref, o_ref, *, n_kernels, use_squaring):
    """Computes one (TM, TN) tile of sum_k exp(-L2 / (bw * mult[k])).

    scalars_ref (SMEM, f32[1 + n_kernels]):
        [0]  = -1 / bandwidth
        [1:] = 1 / multipliers, sorted ascending (so [1] is the smallest).
    xr_ref: (TM, D) row block of X,  xc_ref: (TN, D) column block of X.
    """
    xr = xr_ref[...].astype(jnp.float32)
    xc = xc_ref[...].astype(jnp.float32)

    # Gram tile on the MXU, contracting the last axis of both operands
    # (avoids materializing x.T).
    gram = lax.dot_general(
        xr, xc, (((1,), (1,)), ((), ())), preferred_element_type=jnp.float32
    )                                                       # (TM, TN)
    sq_r = jnp.sum(xr * xr, axis=-1, keepdims=True)         # (TM, 1)
    sq_c = jnp.sum(xc * xc, axis=-1)[None, :]               # (1, TN)
    # Squared pairwise distances (clamped at 0, matching cdist non-negativity).
    l2 = jnp.maximum(sq_r + sq_c - 2.0 * gram, 0.0)         # (TM, TN)

    # scaled = -L2 / bw  -- scalar multiply only, no per-element divide.
    scaled = l2 * scalars_ref[0]

    if use_squaring:
        # multipliers form a x2 geometric series, so successive
        # exp(scaled / mult[k]) terms are repeated squarings of the first:
        # 1 exp + (n_kernels - 1) VPU multiplies instead of n_kernels exps.
        t = jnp.exp(scaled * scalars_ref[1])
        acc = t
        for _ in range(n_kernels - 1):
            t = t * t
            acc = acc + t
    else:
        acc = jnp.zeros_like(scaled)
        for k in range(n_kernels):
            acc = acc + jnp.exp(scaled * scalars_ref[1 + k])

    o_ref[...] = acc.astype(o_ref.dtype)


def _pick_tile(n, preferred, align):
    """Largest multiple of `align` that divides n and is <= preferred, else n."""
    if n <= preferred:
        return n
    t = (preferred // align) * align
    while t >= align:
        if n % t == 0:
            return t
        t -= align
    return n  # whole dimension is always a legal block shape


def rbf_forward(x, *, n_kernels=5, mul_factor=2.0, bandwidth=None,
                tile_m=256, tile_n=512):
    """Pallas TPU implementation of RBF.forward."""
    x = x.astype(jnp.float32)
    n, d = x.shape

    # Bandwidth multipliers, exactly as the PyTorch module builds them.
    mults = np.asarray(
        [mul_factor ** (k - n_kernels // 2) for k in range(n_kernels)],
        dtype=np.float32)
    inv_mults = np.sort((1.0 / mults).astype(np.float32))        # ascending
    use_squaring = n_kernels > 1 and bool(
        np.allclose(inv_mults[1:] / inv_mults[:-1], 2.0))

    # O(N*D) prologue: closed-form sum of squared distances -> bandwidth,
    # so the main kernel is free of any global (N,N) reduction.
    if bandwidth is None:
        row_sq_sum = jnp.sum(jnp.sum(x * x, axis=-1))
        col_sum = jnp.sum(x, axis=0)
        l2_total = 2.0 * n * row_sq_sum - 2.0 * jnp.dot(col_sum, col_sum)
        bw = l2_total / jnp.float32(n * n - n)
    else:
        bw = jnp.float32(bandwidth)
    neg_inv_bw = (-1.0 / bw).astype(jnp.float32)

    scalars = jnp.concatenate(
        [neg_inv_bw.reshape(1), jnp.asarray(inv_mults)]).astype(jnp.float32)

    tm = _pick_tile(n, tile_m, 8)      # sublane dim of the output tile
    tn = _pick_tile(n, tile_n, 128)    # lane dim of the output tile (lane-dense)

    kernel = functools.partial(
        _rbf_tile_kernel, n_kernels=n_kernels, use_squaring=use_squaring)

    return pl.pallas_call(
        kernel,
        out_shape=jax.ShapeDtypeStruct((n, n), jnp.float32),
        grid_spec=pltpu.PrefetchScalarGridSpec(
            num_scalar_prefetch=1,                       # scalars -> SMEM
            grid=(n // tm, n // tn),
            in_specs=[
                pl.BlockSpec((tm, d), lambda i, j, s: (i, 0)),   # X row block
                pl.BlockSpec((tn, d), lambda i, j, s: (j, 0)),   # X col block
            ],
            out_specs=pl.BlockSpec((tm, tn), lambda i, j, s: (i, j)),
        ),
        compiler_params=pltpu.CompilerParams(
            dimension_semantics=("parallel", "parallel")),
    )(scalars, x, x)


def rbf_reference(x, *, n_kernels=5, mul_factor=2.0, bandwidth=None):
    """Pure-JAX reference mirroring the PyTorch forward."""
    x = x.astype(jnp.float32)
    mults = (mul_factor ** (jnp.arange(n_kernels) - n_kernels // 2)).astype(jnp.float32)
    diff = x[:, None, :] - x[None, :, :]
    l2 = jnp.sum(diff * diff, axis=-1)
    n = x.shape[0]
    bw = jnp.sum(l2) / (n * n - n) if bandwidth is None else jnp.float32(bandwidth)
    return jnp.sum(jnp.exp(-l2[None] / (bw * mults)[:, None, None]), axis=0)


if __name__ == "__main__":
    key = jax.random.PRNGKey(0)
    k1, k2 = jax.random.split(key)

    # Small shape consistent with the module's typical use (batch of features).
    x_small = jax.random.normal(k1, (8, 32), dtype=jnp.float32)
    out_small = jax.block_until_ready(rbf_forward(x_small))
    ref_small = rbf_reference(x_small)
    assert out_small.shape == (8, 8)
    assert jnp.allclose(out_small, ref_small, atol=1e-3, rtol=1e-3), "small-case mismatch"

    # Larger lane-dense shape exercising the tiled (multi-block grid) path.
    x_big = jax.random.normal(k2, (512, 32), dtype=jnp.float32)
    out_big = jax.block_until_ready(rbf_forward(x_big))
    ref_big = rbf_reference(x_big)
    assert out_big.shape == (512, 512)
    assert jnp.allclose(out_big, ref_big, atol=1e-3, rtol=1e-3), "tiled-case mismatch"

    print("KERNEL_OK")
</pallas_src>

<mosaic_0001>
module attributes {stable_mosaic.version = 11 : i64} {
  func.func @_rbf_tile_kernel(%arg0: i32, %arg1: i32, %arg2: memref<6xf32, #tpu.memory_space<smem>>, %arg3: memref<8x32xf32, #tpu.memory_space<vmem>>, %arg4: memref<8x32xf32, #tpu.memory_space<vmem>>, %arg5: memref<8x8xf32, #tpu.memory_space<vmem>>) attributes {dimension_semantics = [#tpu.dimension_semantics<parallel>, #tpu.dimension_semantics<parallel>], iteration_bounds = array<i64: 1, 1>, scalar_prefetch = 1 : i64, scratch_operands = 0 : i64, tpu.core_type = #tpu.core_type<tc>, window_params = [{transform_indices = @transform_0, window_bounds = array<i64: 8, 32>}, {transform_indices = @transform_1, window_bounds = array<i64: 8, 32>}, {transform_indices = @transform_2, window_bounds = array<i64: 8, 8>}]} {
    %c0 = arith.constant 0 : index
    %c0_0 = arith.constant 0 : index
    %0 = vector.load %arg3[%c0, %c0_0] : memref<8x32xf32, #tpu.memory_space<vmem>>, vector<8x32xf32>
    %c0_1 = arith.constant 0 : index
    %c0_2 = arith.constant 0 : index
    %1 = vector.load %arg4[%c0_1, %c0_2] : memref<8x32xf32, #tpu.memory_space<vmem>>, vector<8x32xf32>
    %cst = arith.constant dense<0.000000e+00> : vector<8x8xf32>
    %2 = tpu.matmul %0, %1, %cst {dimension_numbers = #tpu.dot_dimension_numbers<[1], [1], [0], [0], [0, 0, 1, 0], [], []>} : vector<8x32xf32>, vector<8x32xf32>, vector<8x8xf32> -> vector<8x8xf32>
    %3 = arith.mulf %0, %0 : vector<8x32xf32>
    %cst_3 = arith.constant dense<0.000000e+00> : vector<8xf32>
    %4 = vector.multi_reduction <add>, %3, %cst_3 [1] : vector<8x32xf32> to vector<8xf32>
    %5 = vector.shape_cast %4 : vector<8xf32> to vector<8x1xf32>
    %6 = arith.mulf %1, %1 : vector<8x32xf32>
    %cst_4 = arith.constant dense<0.000000e+00> : vector<8xf32>
    %7 = vector.multi_reduction <add>, %6, %cst_4 [1] : vector<8x32xf32> to vector<8xf32>
    %8 = vector.shape_cast %7 : vector<8xf32> to vector<1x8xf32>
    %9 = vector.broadcast %5 : vector<8x1xf32> to vector<8x8xf32>
    %10 = vector.broadcast %8 : vector<1x8xf32> to vector<8x8xf32>
    %11 = arith.addf %9, %10 : vector<8x8xf32>
    %cst_5 = arith.constant 2.000000e+00 : f32
    %12 = vector.broadcast %cst_5 : f32 to vector<8x8xf32>
    %13 = arith.mulf %12, %2 : vector<8x8xf32>
    %14 = arith.subf %11, %13 : vector<8x8xf32>
    %cst_6 = arith.constant 0.000000e+00 : f32
    %15 = vector.broadcast %cst_6 : f32 to vector<8x8xf32>
    %16 = arith.maximumf %14, %15 : vector<8x8xf32>
    %c0_7 = arith.constant 0 : index
    %17 = memref.load %arg2[%c0_7] : memref<6xf32, #tpu.memory_space<smem>>
    %18 = vector.broadcast %17 : f32 to vector<8x8xf32>
    %19 = arith.mulf %16, %18 : vector<8x8xf32>
    %c1 = arith.constant 1 : index
    %20 = memref.load %arg2[%c1] : memref<6xf32, #tpu.memory_space<smem>>
    %21 = vector.broadcast %20 : f32 to vector<8x8xf32>
    %22 = arith.mulf %19, %21 : vector<8x8xf32>
    %23 = math.exp %22 : vector<8x8xf32>
    %24 = arith.mulf %23, %23 : vector<8x8xf32>
    %25 = arith.addf %23, %24 : vector<8x8xf32>
    %26 = arith.mulf %24, %24 : vector<8x8xf32>
    %27 = arith.addf %25, %26 : vector<8x8xf32>
    %28 = arith.mulf %26, %26 : vector<8x8xf32>
    %29 = arith.addf %27, %28 : vector<8x8xf32>
    %30 = arith.mulf %28, %28 : vector<8x8xf32>
    %31 = arith.addf %29, %30 : vector<8x8xf32>
    %c0_8 = arith.constant 0 : index
    %c0_9 = arith.constant 0 : index
    %32 = vector.load %arg5[%c0_8, %c0_9] : memref<8x8xf32, #tpu.memory_space<vmem>>, vector<8x8xf32>
    tpu.vector_store %arg5[%c0_8, %c0_9], %31 {strides = array<i32>} : memref<8x8xf32, #tpu.memory_space<vmem>>, vector<8x8xf32>,
    return
  }
  func.func @transform_0(%arg0: i32, %arg1: i32, %arg2: memref<6xf32, #tpu.memory_space<smem>>) -> (i32, i32) {
    %c0_i32 = arith.constant 0 : i32
    %c0_i32_0 = arith.constant 0 : i32
    return %arg0, %c0_i32 : i32, i32
  }
  func.func @transform_1(%arg0: i32, %arg1: i32, %arg2: memref<6xf32, #tpu.memory_space<smem>>) -> (i32, i32) {
    %c0_i32 = arith.constant 0 : i32
    %c0_i32_0 = arith.constant 0 : i32
    return %arg1, %c0_i32 : i32, i32
  }
  func.func @transform_2(%arg0: i32, %arg1: i32, %arg2: memref<6xf32, #tpu.memory_space<smem>>) -> (i32, i32) {
    %c0_i32 = arith.constant 0 : i32
    return %arg0, %arg1 : i32, i32
  }
}

</mosaic_0001>

<llo_original>
// kernel: tpu_custom_call.1
$region0: #{tpu_custom_call.1}
  #allocation0 [shape = 'u32[]', space=smem, size = 0x4, offset = 0x4, fixed_abs, tag = 'smem constant byte address 0x4 - core index']
  #allocation1 [shape = 'u32[72,128]{1,0:T(1,128)}', space=vmem, size = 0x9000, scoped, tag = 'internal scratch']
  #allocation2 [shape = 's32[1]{0}', space=sflag, size = 0x4, scoped, tag = 'scoped memory for tpu_custom_call.1']
  #allocation3 [shape = 'u8[512]{0}', space=smem, size = 0x200, scoped, tag = 'prefetched SMEM operand 0']
  %s0 = inlined_call_operand.hbm [shape: f32[6], index: 0, kind: input, shape index: {}]
  %s1 = inlined_call_operand.hbm [shape: f32[8,32], index: 1, kind: input, shape index: {}]
  %s2 = inlined_call_operand.hbm [shape: f32[8,32], index: 2, kind: input, shape index: {}]
  %s3 = inlined_call_operand.hbm [shape: f32[8,8], index: 3, kind: output, shape index: {}]
  %s4 = sld [smem:[#allocation0]]
  $region26: #{tpu_custom_call.1} parent=0
    _
  %s6 = ssub.s32 1, %s4
  %s7 = scalar_select 0, %s6, %s4
  %s9 = sshll.u32 %s0, 4
  %s10 = int_to_ptr.hbm [resolvable:$true] %s9
  %12 = dma.hbm_to_smem %s10, 16, [#allocation3], [#allocation2]
  %14 = dma.done [#allocation2], 16
  %15 = sfence
  $region1: #{tpu_custom_call.1} parent=0
    #allocation4 [shape = 'u8[4096]{0}', space=vmem, size = 0x1000, scoped, tag = 'input window, operand 1, single buffered']
    #allocation5 [shape = 's32[1]{0}', space=sflag, size = 0x4, scoped, tag = 'scoped memory for tpu_custom_call.1']
    #allocation6 [shape = 's32[1]{0}', space=sflag, size = 0x4, scoped, tag = 'scoped memory for tpu_custom_call.1']
    #allocation7 [shape = 'u8[4096]{0}', space=vmem, size = 0x1000, scoped, tag = 'input window, operand 2, single buffered']
    #allocation8 [shape = 's32[1]{0}', space=sflag, size = 0x4, scoped, tag = 'scoped memory for tpu_custom_call.1']
    #allocation9 [shape = 'u8[4096]{0}', space=vmem, size = 0x1000, scoped, tag = 'output window, operand 0, single buffered']
    %16 = vsyncpa [#allocation5], 0
    %17 = vsyncpa [#allocation8], 0
    %18 = vsyncpa [#allocation6], 0
    // Predicated region
    $region2: #{tpu_custom_call.1} parent=1 // pred_check
      _
    $region3: #{tpu_custom_call.1} parent=1 // pred_check_branch
      %20 = sbr.rel (0) target = $region5
    $region4: #{tpu_custom_call.1} parent=1 // pred_region
      %22 = vsyncadd [#allocation5], 0
      %s24 = sshll.u32 %s1, 4
      %s25 = int_to_ptr.hbm [resolvable:$true] %s24
      %s26 = sshll.u32 [#allocation4], 4
      %s27 = int_to_ptr.vmem [resolvable:$true] %s26
      %29 = dma.hbm_to_vmem [thread:$0]  %s25, 128, %s27, [#allocation5]
    $region5: #{tpu_custom_call.1} parent=1 // pred_fallthru
      _
    // Predicated region
    $region6: #{tpu_custom_call.1} parent=1 // pred_check
      _
    $region7: #{tpu_custom_call.1} parent=1 // pred_check_branch
      %31 = sbr.rel (0) target = $region9
    $region8: #{tpu_custom_call.1} parent=1 // pred_region
      %33 = vsyncadd [#allocation8], 0
      %s35 = sshll.u32 %s2, 4
      %s36 = int_to_ptr.hbm [resolvable:$true] %s35
      %s37 = sshll.u32 [#allocation7], 4
      %s38 = int_to_ptr.vmem [resolvable:$true] %s37
      %40 = dma.hbm_to_vmem [thread:$0]  %s36, 128, %s38, [#allocation8]
    $region9: #{tpu_custom_call.1} parent=1 // pred_fallthru
      _
    // Predicated region
    $region10: #{tpu_custom_call.1} parent=1 // pred_check
      _
    $region11: #{tpu_custom_call.1} parent=1 // pred_check_branch
      %42 = sbr.rel (0) target = $region13
    $region12: #{tpu_custom_call.1} parent=1 // pred_region
      %44 = dma.done [#allocation5], 128
    $region13: #{tpu_custom_call.1} parent=1 // pred_fallthru
      _
    // Predicated region
    $region14: #{tpu_custom_call.1} parent=1 // pred_check
      _
    $region15: #{tpu_custom_call.1} parent=1 // pred_check_branch
      %46 = sbr.rel (0) target = $region17
    $region16: #{tpu_custom_call.1} parent=1 // pred_region
      %48 = dma.done [#allocation8], 128
    $region17: #{tpu_custom_call.1} parent=1 // pred_fallthru
      _
    %v49 = vld [vmem:[#allocation4] sm:$0xff]
    %v50 = vld [vmem:[#allocation7] sm:$0xff]
    %vm51 = vcmask 261120
    %v53 = vsel %vm51, %v49, 0
    %v56 = vsel %vm51, %v50, 0
    %58 = vmatpush.xpose.msra.mxu0 0.0
    %59 = vmatpush.xpose.msra.mxu0 0.0
    %60 = vmatpush.xpose.msra.mxu0 0.0
    %61 = vmatpush.xpose.msra.mxu0 0.0
    %62 = vmatpush.xpose.msra.mxu0 0.0
    %63 = vmatpush.xpose.msra.mxu0 0.0
    %64 = vmatpush.xpose.msra.mxu0 0.0
    %65 = vmatpush.xpose.msra.mxu0 0.0
    %66 = vmatpush.xpose.msra.mxu0 0.0
    %67 = vmatpush.xpose.msra.mxu0 0.0
    %68 = vmatpush.xpose.msra.mxu0 0.0
    %69 = vmatpush.xpose.msra.mxu0 0.0
    %70 = vmatpush.xpose.msra.mxu0 0.0
    %71 = vmatpush.xpose.msra.mxu0 0.0
    %72 = vmatpush.xpose.msra.mxu0 0.0
    %73 = vmatpush.xpose.msra.mxu0 %v56
    %74 = vmatmul.f32.gmra.mxu0 %v53
    %v75 = vpop.f32.mrf.mxu0
    %v76 = vadd.f32 0.0, %v75
    %77 = vdwg.mxu0
    %v78 = vmul.f32 %v49, %v49
    %v79 = vsel %vm51, %v78, 0.0
    %80 = vadd.xlane.f32.xlu0 %v79
    %v81 = vpop.xlane.xlu0 %80
    %v82 = vmul.f32 %v50, %v50
    %v83 = vsel %vm51, %v82, 0.0
    %84 = vadd.xlane.f32.xlu0 %v83
    %v85 = vpop.xlane.xlu0 %84
    %v87 = vlaneseq
    %v88 = vand.u32 %v87, 127
    %v89 = vperm.slane %v85, %v88
    %vm90 = vcmask 1042434
    %v91 = vsel %vm90, %v89, %v89
    %vm92 = vcmask 1043459
    %v93 = vsel %vm92, %v89, %v91
    %vm94 = vcmask 1044484
    %v95 = vsel %vm94, %v89, %v93
    %vm96 = vcmask 1045509
    %v97 = vsel %vm96, %v89, %v95
    %vm98 = vcmask 1046534
    %v99 = vsel %vm98, %v89, %v97
    %vm100 = vcmask 1047559
    %v101 = vsel %vm100, %v89, %v99
    %v103 = vadd.f32 %v81, %v101
    %v104 = vmul.f32 %v76, 2.0
    %v105 = vsub.f32 %v103, %v104
    %v106 = vmax.f32 %v105, 0.0
    %s107 = sld [smem:[#allocation3]]
    %v108 = vstv %s107
    %v109 = vmul.f32 %v106, %v108
    %s110 = sld [smem:[#allocation3 + $0x1]]
    %v111 = vstv %s110
    %v112 = vmul.f32 %v109, %v111
    %v113 = vmul.f32 %v112, 1.442695
    %v114 = vpow.pop %v113
    %v115 = vmul.f32 %v114, %v114
    %v116 = vadd.f32 %v114, %v115
    %v117 = vmul.f32 %v115, %v115
    %v118 = vadd.f32 %v116, %v117
    %v119 = vmul.f32 %v117, %v117
    %v120 = vadd.f32 %v118, %v119
    %v121 = vmul.f32 %v119, %v119
    %v122 = vadd.f32 %v120, %v121
    %vm123 = vcmask 64512
    %124 = vst.msk [vmem:[#allocation9] sm:$0xff] %vm123, %v122
    // Predicated region
    $region18: #{tpu_custom_call.1} parent=1 // pred_check
      _
    $region19: #{tpu_custom_call.1} parent=1 // pred_check_branch
      %126 = sbr.rel (0) target = $region21
    $region20: #{tpu_custom_call.1} parent=1 // pred_region
      %128 = vsyncadd [#allocation6], 0
      %s130 = sshll.u32 [#allocation9], 4
      %s131 = int_to_ptr.vmem [resolvable:$true] %s130
      %s132 = sshll.u32 %s3, 4
      %s133 = int_to_ptr.hbm [resolvable:$true] %s132
      %135 = dma.vmem_to_hbm [thread:$0]  %s131, 128, %s133, [#allocation6]
    $region21: #{tpu_custom_call.1} parent=1 // pred_fallthru
      _
    // Predicated region
    $region22: #{tpu_custom_call.1} parent=1 // pred_check
      _
    $region23: #{tpu_custom_call.1} parent=1 // pred_check_branch
      %137 = sbr.rel (0) target = $region25
    $region24: #{tpu_custom_call.1} parent=1 // pred_region
      %139 = dma.done [#allocation6], 128
    $region25: #{tpu_custom_call.1} parent=1 // pred_fallthru
      _
    %140 = vsyncpa [#allocation5], 1
    %141 = vsyncpa [#allocation8], 1
    %142 = vsyncpa [#allocation6], 1

</llo_original>
